<compile_context>
chip_gen: v7x
topology: tpu7x:2x2x1
jax: 0.10.0
libtpu: 0.0.40
codegen_flags: <defaults>
</compile_context>

<pallas_src>
import functools
import jax
import jax.numpy as jnp
from jax.experimental import pallas as pl
from jax.experimental.pallas import tpu as pltpu

LANE = 128
NEG_BIG = -1e30  # padded classifier-bias value: removed from softmax denominator


def _pad_to(n, m):
    return ((n + m - 1) // m) * m


# ------------------------------ fused kernel ------------------------------- #

def _fused_forward_kernel(*refs, arch, adj_ids, num_gates):
    """Whole forward pass in one kernel.  All intermediates stay on-chip.

    refs layout (inputs, then outputs):
      gate (SMEM), s0, pre_w, pre_b,
      [w_i, b_i for each arch index with arch[i] == 0],
      [adj_e for e in adj_ids],
      cls_w, cls_b,
      logits_out, feat_out
    """
    arch = list(arch)
    it = iter(refs)
    gate_ref = next(it)
    s0_ref = next(it)
    pre_w_ref = next(it)
    pre_b_ref = next(it)
    mlp = {}
    for i, e in enumerate(arch):
        if e == 0:
            w_ref = next(it)
            b_ref = next(it)
            mlp[i] = (w_ref, b_ref)
    adj_refs = {e: next(it) for e in adj_ids}
    cls_w_ref = next(it)
    cls_b_ref = next(it)
    logits_ref = next(it)
    feat_ref = next(it)

    n = s0_ref.shape[0]
    hpad = pre_w_ref.shape[1]

    # Hoist all gate scalar reads (SMEM) up front, off the critical path.
    gates = [gate_ref[k] for k in range(num_gates)]

    def apply_op(i, x):
        e = arch[i]
        if e == 0:
            w_ref, b_ref = mlp[i]
            y = jnp.dot(x, w_ref[...], preferred_element_type=jnp.float32)
            y = y + b_ref[...]
            return jnp.maximum(y, 0.0)  # ReLU; eval-mode dropout == identity
        # Graph op: adj @ x (adjacency is VMEM resident, contraction chained
        # directly off the previous intermediate -> no HBM writeback).
        return jnp.dot(adj_refs[e][...], x, preferred_element_type=jnp.float32)

    def gated_sum(temp_p, num_p, total_p):
        if not num_p:  # guard: empty -> zeros of the hidden shape
            return jnp.zeros((n, hpad), jnp.float32)
        acc = None
        for idx in num_p:
            term = gates[total_p - len(num_p) + idx] * temp_p[idx]
            acc = term if acc is None else acc + term
        return acc

    def sum_list(xs):
        if not xs:  # guard: empty -> zeros of the hidden shape
            return jnp.zeros((n, hpad), jnp.float32)
        acc = xs[0]
        for x in xs[1:]:
            acc = acc + x
        return acc

    # ---------------- forward control flow (static arch, fully unrolled) ----
    temp_p, num_p, point, total_p = [], [], 0, 0
    temp_t = []
    res = None
    for i in range(len(arch)):
        if i == 0:
            # preprocess0: Linear, no ReLU
            res = jnp.dot(s0_ref[...], pre_w_ref[...],
                          preferred_element_type=jnp.float32) + pre_b_ref[...]
            temp_p.append(res); num_p.append(i); total_p += 1
            res = apply_op(i, res)
            if arch[i] != 0:
                temp_p.append(res); num_p.append(i); total_p += 1
            else:
                temp_t.append(res); num_p = []; temp_p = []
        elif arch[i - 1] != 0:
            if arch[i] == 0:
                res = gated_sum(temp_p, num_p, total_p)
                res = apply_op(i, res)
                temp_t.append(res); num_p = []; temp_p = []
            else:
                res = apply_op(i, res)
                temp_p.append(res); num_p.append(i - point); total_p += 1
        elif arch[i] != 0:
            res = apply_op(i, res)
            temp_p.append(res); point = i; num_p.append(i - point); total_p += 1
        else:
            res = sum_list(temp_t)
            res = apply_op(i, res)
            temp_t.append(res)

    if len(num_p) > 0 or len(temp_p) > 0:
        res = gated_sum(temp_p, num_p, total_p)
    else:
        res = sum_list(temp_t)

    # last_feature (lane-dense, padded to 128; pads are exact zeros)
    feat_ref[...] = res.astype(feat_ref.dtype)

    # classifier + log_softmax fused.  Padded bias columns hold -1e30 so
    # exp(pad - max) underflows to 0 and valid columns are exact.
    logits = jnp.dot(res, cls_w_ref[...], preferred_element_type=jnp.float32)
    logits = logits + cls_b_ref[...]
    m = jnp.max(logits, axis=1, keepdims=True)
    s = logits - m
    lse = jnp.log(jnp.sum(jnp.exp(s), axis=1, keepdims=True))
    logits_ref[...] = (s - lse).astype(logits_ref.dtype)


# --------------------------- Model (JAX wrapper) ---------------------------- #

class ModelOpCombineWithoutT:
    """JAX/Pallas port of ModelOp_combine_withoutT (eval-mode forward),
    executed as a single fused Pallas kernel."""

    def __init__(self, arch, adjs, feat_dim, hid_dim, num_classes, key):
        self.arch = list(arch)
        self.adjs = adjs  # dict: 1..5 -> (N, N) adjacency (jnp arrays)
        self.n_nodes = int(next(iter(adjs.values())).shape[0])
        self.feat_dim = feat_dim
        self.hid_dim = hid_dim
        self.num_classes = num_classes
        self.hid_pad = _pad_to(hid_dim, LANE)
        self.cls_pad = _pad_to(num_classes, LANE)

        self.mlp_ids = [i for i, e in enumerate(self.arch) if e == 0]
        self.adj_ids = sorted({e for e in self.arch if e != 0})

        num_gates = 1 + sum(1 for e in self.arch if e != 0)
        n_mlp = len(self.mlp_ids)
        keys = list(jax.random.split(key, 2 * n_mlp + 4 + 1))

        def pop():
            return keys.pop()

        def linear_init(fan_in, fan_out):
            # Mirrors torch.nn.Linear default init (uniform(+-1/sqrt(fan_in))).
            bound = 1.0 / float(fan_in) ** 0.5
            w = jax.random.uniform(pop(), (fan_in, fan_out), jnp.float32, -bound, bound)
            b = jax.random.uniform(pop(), (fan_out,), jnp.float32, -bound, bound)
            return w, b

        # unpadded params (reference) -- same init order as original script
        self.mlp_params = {}
        for i in self.mlp_ids:
            self.mlp_params[i] = linear_init(hid_dim, hid_dim)
        self.pre_w, self.pre_b = linear_init(feat_dim, hid_dim)      # preprocess0
        self.cls_w, self.cls_b = linear_init(hid_dim, num_classes)   # classifier
        self.gate = 1e-5 * jax.random.normal(pop(), (num_gates,), jnp.float32)

        # lane-padded copies fed to the fused kernel
        hp, cp = self.hid_pad, self.cls_pad
        self.pre_w_p = jnp.pad(self.pre_w, ((0, 0), (0, hp - hid_dim)))
        self.pre_b_p = jnp.pad(self.pre_b, (0, hp - hid_dim)).reshape(1, hp)
        self.mlp_params_p = {}
        for i in self.mlp_ids:
            w, b = self.mlp_params[i]
            self.mlp_params_p[i] = (
                jnp.pad(w, ((0, hp - hid_dim), (0, hp - hid_dim))),
                jnp.pad(b, (0, hp - hid_dim)).reshape(1, hp),
            )
        self.cls_w_p = jnp.pad(self.cls_w, ((0, hp - hid_dim), (0, cp - num_classes)))
        self.cls_b_p = jnp.pad(self.cls_b, (0, cp - num_classes),
                               constant_values=NEG_BIG).reshape(1, cp)

        self._build_fused_call(num_gates)
        self._jit_forward = jax.jit(self._forward_impl)

    def _build_fused_call(self, num_gates):
        n = self.n_nodes
        n_in = 4 + 2 * len(self.mlp_ids) + len(self.adj_ids) + 2
        kernel = functools.partial(
            _fused_forward_kernel,
            arch=tuple(self.arch),
            adj_ids=tuple(self.adj_ids),
            num_gates=num_gates,
        )
        in_specs = (
            [pl.BlockSpec(memory_space=pltpu.MemorySpace.SMEM)]  # gates
            + [pl.BlockSpec(memory_space=pltpu.MemorySpace.VMEM)] * (n_in - 1)
        )
        out_specs = (
            pl.BlockSpec(memory_space=pltpu.MemorySpace.VMEM),
            pl.BlockSpec(memory_space=pltpu.MemorySpace.VMEM),
        )
        out_shape = (
            jax.ShapeDtypeStruct((n, self.cls_pad), jnp.float32),  # logits (padded)
            jax.ShapeDtypeStruct((n, self.hid_pad), jnp.float32),  # last_feature (padded)
        )
        self._fused = pl.pallas_call(
            kernel,
            out_shape=out_shape,
            in_specs=in_specs,
            out_specs=out_specs,
        )

    def _forward_impl(self, s0):
        inputs = [self.gate, s0, self.pre_w_p, self.pre_b_p]
        for i in self.mlp_ids:
            w_p, b_p = self.mlp_params_p[i]
            inputs += [w_p, b_p]
        inputs += [self.adjs[e] for e in self.adj_ids]
        inputs += [self.cls_w_p, self.cls_b_p]
        logits_pad, feat_pad = self._fused(*inputs)
        return (logits_pad[:, : self.num_classes], feat_pad[:, : self.hid_dim])

    def forward(self, s0):
        return self._jit_forward(s0)

    # Pure-JAX reference (unpadded) for correctness checking.
    def reference_forward(self, s0):
        arch = self.arch

        def apply_op(i, x):
            e = arch[i]
            if e == 0:
                w, b = self.mlp_params[i]
                return jnp.maximum(x @ w + b, 0.0)
            return self.adjs[e] @ x

        def gated_sum(temp_p, num_p, total_p):
            if not num_p:
                return jnp.zeros((s0.shape[0], self.hid_dim), jnp.float32)
            acc = None
            for idx in num_p:
                t = self.gate[total_p - len(num_p) + idx] * temp_p[idx]
                acc = t if acc is None else acc + t
            return acc

        def sum_list(xs):
            if not xs:
                return jnp.zeros((s0.shape[0], self.hid_dim), jnp.float32)
            acc = xs[0]
            for x in xs[1:]:
                acc = acc + x
            return acc

        temp_p, num_p, point, total_p = [], [], 0, 0
        temp_t = []
        res = None
        for i in range(len(arch)):
            if i == 0:
                res = s0 @ self.pre_w + self.pre_b
                temp_p.append(res); num_p.append(i); total_p += 1
                res = apply_op(i, res)
                if arch[i] != 0:
                    temp_p.append(res); num_p.append(i); total_p += 1
                else:
                    temp_t.append(res); num_p = []; temp_p = []
            elif arch[i - 1] != 0:
                if arch[i] == 0:
                    res = gated_sum(temp_p, num_p, total_p)
                    res = apply_op(i, res)
                    temp_t.append(res); num_p = []; temp_p = []
                else:
                    res = apply_op(i, res)
                    temp_p.append(res); num_p.append(i - point); total_p += 1
            elif arch[i] != 0:
                res = apply_op(i, res)
                temp_p.append(res); point = i; num_p.append(i - point); total_p += 1
            else:
                res = sum_list(temp_t)
                res = apply_op(i, res)
                temp_t.append(res)

        if len(num_p) > 0 or len(temp_p) > 0:
            res = gated_sum(temp_p, num_p, total_p)
        else:
            res = sum_list(temp_t)

        feat = res
        logits = jax.nn.log_softmax(feat @ self.cls_w + self.cls_b, axis=1)
        return logits, feat


# ---------------------------------- main ----------------------------------- #

if __name__ == "__main__":
    N, FEAT, HID, NCLS = 8, 16, 32, 8
    arch = [1, 0, 2, 3]  # exercises Graph ops, MLP op, gated sums, classifier

    key = jax.random.PRNGKey(0)
    k_adj, k_model, k_x = jax.random.split(key, 3)

    # Five adjacency operators (row-normalized dense matrices), deterministic.
    adj_keys = jax.random.split(k_adj, 5)
    adjs = {}
    for idx in range(1, 6):
        a = jax.random.uniform(adj_keys[idx - 1], (N, N), jnp.float32)
        adjs[idx] = a / jnp.sum(a, axis=1, keepdims=True)

    model = ModelOpCombineWithoutT(arch, adjs, FEAT, HID, NCLS, k_model)
    s0 = jax.random.normal(k_x, (N, FEAT), jnp.float32)

    logits, last_feature = model.forward(s0)
    logits, last_feature = jax.block_until_ready((logits, last_feature))

    assert logits.shape == (N, NCLS) and last_feature.shape == (N, HID)
    # self-consistency: exp(log_softmax) rows sum to 1
    assert bool(jnp.allclose(jnp.exp(logits).sum(axis=1), 1.0, atol=1e-3))

    # correctness vs. pure-JAX reference of the same (unpadded) computation
    ref_logits, ref_feat = model.reference_forward(s0)
    assert bool(jnp.allclose(logits, ref_logits, rtol=1e-3, atol=1e-5))
    assert bool(jnp.allclose(last_feature, ref_feat, rtol=1e-3, atol=1e-6))

    print("KERNEL_OK")
</pallas_src>

<mosaic_0001>
module attributes {stable_mosaic.version = 11 : i64} {
  func.func @_fused_forward_kernel(%arg0: memref<4xf32, #tpu.memory_space<smem>>, %arg1: memref<8x16xf32, #tpu.memory_space<vmem>>, %arg2: memref<16x128xf32, #tpu.memory_space<vmem>>, %arg3: memref<1x128xf32, #tpu.memory_space<vmem>>, %arg4: memref<128x128xf32, #tpu.memory_space<vmem>>, %arg5: memref<1x128xf32, #tpu.memory_space<vmem>>, %arg6: memref<8x8xf32, #tpu.memory_space<vmem>>, %arg7: memref<8x8xf32, #tpu.memory_space<vmem>>, %arg8: memref<8x8xf32, #tpu.memory_space<vmem>>, %arg9: memref<128x128xf32, #tpu.memory_space<vmem>>, %arg10: memref<1x128xf32, #tpu.memory_space<vmem>>, %arg11: memref<8x128xf32, #tpu.memory_space<vmem>>, %arg12: memref<8x128xf32, #tpu.memory_space<vmem>>) attributes {dimension_semantics = [], scalar_prefetch = 0 : i64, scratch_operands = 0 : i64, tpu.core_type = #tpu.core_type<tc>} {
    %c0 = arith.constant 0 : index
    %0 = memref.load %arg0[%c0] : memref<4xf32, #tpu.memory_space<smem>>
    %c2 = arith.constant 2 : index
    %1 = memref.load %arg0[%c2] : memref<4xf32, #tpu.memory_space<smem>>
    %c3 = arith.constant 3 : index
    %2 = memref.load %arg0[%c3] : memref<4xf32, #tpu.memory_space<smem>>
    %c0_0 = arith.constant 0 : index
    %c0_1 = arith.constant 0 : index
    %3 = vector.load %arg1[%c0_0, %c0_1] : memref<8x16xf32, #tpu.memory_space<vmem>>, vector<8x16xf32>
    %c0_2 = arith.constant 0 : index
    %c0_3 = arith.constant 0 : index
    %4 = vector.load %arg2[%c0_2, %c0_3] : memref<16x128xf32, #tpu.memory_space<vmem>>, vector<16x128xf32>
    %cst = arith.constant dense<0.000000e+00> : vector<8x128xf32>
    %5 = tpu.matmul %3, %4, %cst {dimension_numbers = #tpu.dot_dimension_numbers<[1], [0], [0], [1], [0, 0, 1, 1], [], []>} : vector<8x16xf32>, vector<16x128xf32>, vector<8x128xf32> -> vector<8x128xf32>
    %c0_4 = arith.constant 0 : index
    %c0_5 = arith.constant 0 : index
    %6 = vector.load %arg3[%c0_4, %c0_5] : memref<1x128xf32, #tpu.memory_space<vmem>>, vector<1x128xf32>
    %7 = vector.broadcast %6 : vector<1x128xf32> to vector<8x128xf32>
    %8 = arith.addf %5, %7 : vector<8x128xf32>
    %9 = vector.broadcast %0 : f32 to vector<8x128xf32>
    %10 = arith.mulf %9, %8 : vector<8x128xf32>
    %11 = vector.broadcast %0 : f32 to vector<8x128xf32>
    %12 = arith.mulf %11, %8 : vector<8x128xf32>
    %13 = arith.addf %10, %12 : vector<8x128xf32>
    %c0_6 = arith.constant 0 : index
    %c0_7 = arith.constant 0 : index
    %14 = vector.load %arg4[%c0_6, %c0_7] : memref<128x128xf32, #tpu.memory_space<vmem>>, vector<128x128xf32>
    %cst_8 = arith.constant dense<0.000000e+00> : vector<8x128xf32>
    %15 = tpu.matmul %13, %14, %cst_8 {dimension_numbers = #tpu.dot_dimension_numbers<[1], [0], [0], [1], [0, 0, 1, 1], [], []>} : vector<8x128xf32>, vector<128x128xf32>, vector<8x128xf32> -> vector<8x128xf32>
    %c0_9 = arith.constant 0 : index
    %c0_10 = arith.constant 0 : index
    %16 = vector.load %arg5[%c0_9, %c0_10] : memref<1x128xf32, #tpu.memory_space<vmem>>, vector<1x128xf32>
    %17 = vector.broadcast %16 : vector<1x128xf32> to vector<8x128xf32>
    %18 = arith.addf %15, %17 : vector<8x128xf32>
    %cst_11 = arith.constant 0.000000e+00 : f32
    %19 = vector.broadcast %cst_11 : f32 to vector<8x128xf32>
    %20 = arith.maximumf %18, %19 : vector<8x128xf32>
    %c0_12 = arith.constant 0 : index
    %c0_13 = arith.constant 0 : index
    %21 = vector.load %arg7[%c0_12, %c0_13] : memref<8x8xf32, #tpu.memory_space<vmem>>, vector<8x8xf32>
    %cst_14 = arith.constant dense<0.000000e+00> : vector<8x128xf32>
    %22 = tpu.matmul %21, %20, %cst_14 {dimension_numbers = #tpu.dot_dimension_numbers<[1], [0], [0], [1], [0, 0, 1, 1], [], []>} : vector<8x8xf32>, vector<8x128xf32>, vector<8x128xf32> -> vector<8x128xf32>
    %c0_15 = arith.constant 0 : index
    %c0_16 = arith.constant 0 : index
    %23 = vector.load %arg8[%c0_15, %c0_16] : memref<8x8xf32, #tpu.memory_space<vmem>>, vector<8x8xf32>
    %cst_17 = arith.constant dense<0.000000e+00> : vector<8x128xf32>
    %24 = tpu.matmul %23, %22, %cst_17 {dimension_numbers = #tpu.dot_dimension_numbers<[1], [0], [0], [1], [0, 0, 1, 1], [], []>} : vector<8x8xf32>, vector<8x128xf32>, vector<8x128xf32> -> vector<8x128xf32>
    %25 = vector.broadcast %1 : f32 to vector<8x128xf32>
    %26 = arith.mulf %25, %22 : vector<8x128xf32>
    %27 = vector.broadcast %2 : f32 to vector<8x128xf32>
    %28 = arith.mulf %27, %24 : vector<8x128xf32>
    %29 = arith.addf %26, %28 : vector<8x128xf32>
    %c0_18 = arith.constant 0 : index
    %c0_19 = arith.constant 0 : index
    %30 = vector.load %arg12[%c0_18, %c0_19] : memref<8x128xf32, #tpu.memory_space<vmem>>, vector<8x128xf32>
    tpu.vector_store %arg12[%c0_18, %c0_19], %29 {strides = array<i32>} : memref<8x128xf32, #tpu.memory_space<vmem>>, vector<8x128xf32>,
    %c0_20 = arith.constant 0 : index
    %c0_21 = arith.constant 0 : index
    %31 = vector.load %arg9[%c0_20, %c0_21] : memref<128x128xf32, #tpu.memory_space<vmem>>, vector<128x128xf32>
    %cst_22 = arith.constant dense<0.000000e+00> : vector<8x128xf32>
    %32 = tpu.matmul %29, %31, %cst_22 {dimension_numbers = #tpu.dot_dimension_numbers<[1], [0], [0], [1], [0, 0, 1, 1], [], []>} : vector<8x128xf32>, vector<128x128xf32>, vector<8x128xf32> -> vector<8x128xf32>
    %c0_23 = arith.constant 0 : index
    %c0_24 = arith.constant 0 : index
    %33 = vector.load %arg10[%c0_23, %c0_24] : memref<1x128xf32, #tpu.memory_space<vmem>>, vector<1x128xf32>
    %34 = vector.broadcast %33 : vector<1x128xf32> to vector<8x128xf32>
    %35 = arith.addf %32, %34 : vector<8x128xf32>
    %cst_25 = arith.constant dense<0xFF800000> : vector<8xf32>
    %36 = vector.multi_reduction <maximumf>, %35, %cst_25 [1] : vector<8x128xf32> to vector<8xf32>
    %37 = vector.shape_cast %36 : vector<8xf32> to vector<8x1xf32>
    %38 = vector.broadcast %37 : vector<8x1xf32> to vector<8x128xf32>
    %39 = arith.subf %35, %38 : vector<8x128xf32>
    %40 = math.exp %39 : vector<8x128xf32>
    %cst_26 = arith.constant dense<0.000000e+00> : vector<8xf32>
    %41 = vector.multi_reduction <add>, %40, %cst_26 [1] : vector<8x128xf32> to vector<8xf32>
    %42 = vector.shape_cast %41 : vector<8xf32> to vector<8x1xf32>
    %43 = math.log %42 : vector<8x1xf32>
    %44 = vector.broadcast %43 : vector<8x1xf32> to vector<8x128xf32>
    %45 = arith.subf %39, %44 : vector<8x128xf32>
    %c0_27 = arith.constant 0 : index
    %c0_28 = arith.constant 0 : index
    %46 = vector.load %arg11[%c0_27, %c0_28] : memref<8x128xf32, #tpu.memory_space<vmem>>, vector<8x128xf32>
    tpu.vector_store %arg11[%c0_27, %c0_28], %45 {strides = array<i32>} : memref<8x128xf32, #tpu.memory_space<vmem>>, vector<8x128xf32>,
    return
  }
}

</mosaic_0001>

<llo_original>
// kernel: _forward_impl.1
$region0: #{_forward_impl.1}
  #allocation0 [shape = 'u32[]', space=smem, size = 0x4, offset = 0x4, fixed_abs, tag = 'smem constant byte address 0x4 - core index']
  #allocation1 [shape = 'u32[144,128]{1,0:T(1,128)}', space=vmem, size = 0x12000, scoped, tag = 'internal scratch']
  %s0 = inlined_call_operand.hbm [shape: f32[4], index: 0, kind: input, shape index: {}]
  %s1 = inlined_call_operand.hbm [shape: f32[8,16], index: 1, kind: input, shape index: {}]
  %s2 = inlined_call_operand.hbm [shape: f32[16,128], index: 2, kind: input, shape index: {}]
  %s3 = inlined_call_operand.hbm [shape: f32[1,128], index: 3, kind: input, shape index: {}]
  %s4 = inlined_call_operand.hbm [shape: f32[128,128], index: 4, kind: input, shape index: {}]
  %s5 = inlined_call_operand.vmem [shape: f32[1,128], index: 5, kind: input, shape index: {}]
  %s6 = inlined_call_operand.hbm [shape: f32[8,8], index: 6, kind: input, shape index: {}]
  %s7 = inlined_call_operand.vmem [shape: f32[8,8], index: 7, kind: input, shape index: {}]
  %s8 = inlined_call_operand.vmem [shape: f32[8,8], index: 8, kind: input, shape index: {}]
  %s9 = inlined_call_operand.hbm [shape: f32[128,128], index: 9, kind: input, shape index: {}]
  %s10 = inlined_call_operand.vmem [shape: f32[1,128], index: 10, kind: input, shape index: {}]
  %s11 = inlined_call_operand.hbm [shape: f32[8,128], index: 11, kind: output, shape index: {0}]
  %s12 = inlined_call_operand.hbm [shape: f32[8,128], index: 12, kind: output, shape index: {1}]
  %13 = xla_tuple %s11, %s12
  %s14 = sld [smem:[#allocation0]]
  $region90: #{_forward_impl.1} parent=0
    _
  %s16 = ssub.s32 1, %s14
  %s17 = scalar_select 0, %s16, %s14
  $region1: #{_forward_impl.1} parent=0
    #allocation2 [shape = 'u8[512]{0}', space=smem, size = 0x200, scoped, tag = 'input window, operand 0, single buffered']
    #allocation3 [shape = 's32[1]{0}', space=sflag, size = 0x4, scoped, tag = 'scoped memory for _forward_impl.1']
    #allocation4 [shape = 's32[1]{0}', space=sflag, size = 0x4, scoped, tag = 'scoped memory for _forward_impl.1']
    #allocation5 [shape = 's32[1]{0}', space=sflag, size = 0x4, scoped, tag = 'scoped memory for _forward_impl.1']
    #allocation6 [shape = 'u8[4096]{0}', space=vmem, size = 0x1000, scoped, tag = 'input window, operand 1, single buffered']
    #allocation7 [shape = 'u8[8192]{0}', space=vmem, size = 0x2000, scoped, tag = 'input window, operand 2, single buffered']
    #allocation8 [shape = 's32[1]{0}', space=sflag, size = 0x4, scoped, tag = 'scoped memory for _forward_impl.1']
    #allocation9 [shape = 'u8[512]{0}', space=vmem, size = 0x400, scoped, tag = 'input window, operand 3, single buffered']
    #allocation10 [shape = 'u8[65536]{0}', space=vmem, size = 0x10000, scoped, tag = 'input window, operand 4, single buffered']
    #allocation11 [shape = 's32[1]{0}', space=sflag, size = 0x4, scoped, tag = 'scoped memory for _forward_impl.1']
    #allocation12 [shape = 'u8[4096]{0}', space=vmem, size = 0x1000, scoped, tag = 'input window, operand 6, single buffered']
    #allocation13 [shape = 'u8[65536]{0}', space=vmem, size = 0x10000, scoped, tag = 'input window, operand 9, single buffered']
    #allocation14 [shape = 's32[1]{0}', space=sflag, size = 0x4, scoped, tag = 'scoped memory for _forward_impl.1']
    #allocation15 [shape = 'u8[4096]{0}', space=vmem, size = 0x1000, scoped, tag = 'output window, operand 0, single buffered']
    #allocation16 [shape = 'u8[4096]{0}', space=vmem, size = 0x1000, scoped, tag = 'output window, operand 1, single buffered']
    #allocation17 [shape = 's32[1]{0}', space=sflag, size = 0x4, scoped, tag = 'scoped memory for _forward_impl.1']
    %18 = vsyncpa [#allocation5], 0
    %19 = vsyncpa [#allocation3], 0
    %20 = vsyncpa [#allocation8], 0
    %21 = vsyncpa [#allocation11], 0
    %22 = vsyncpa [#allocation14], 0
    %23 = vsyncpa [#allocation4], 0
    %24 = vsyncpa [#allocation17], 0
    // Predicated region
    $region2: #{_forward_impl.1} parent=1 // pred_check
      _
    $region3: #{_forward_impl.1} parent=1 // pred_check_branch
      %26 = sbr.rel (0) target = $region5
    $region4: #{_forward_impl.1} parent=1 // pred_region
      %s28 = ssub.s32 16, 16
      %29 = vsyncadd [#allocation5], %s28
      %32 = dma.hbm_to_smem %s0, 16, [#allocation2], [#allocation5]
    $region5: #{_forward_impl.1} parent=1 // pred_fallthru
      _
    // Predicated region
    $region6: #{_forward_impl.1} parent=1 // pred_check
      _
    $region7: #{_forward_impl.1} parent=1 // pred_check_branch
      %34 = sbr.rel (0) target = $region9
    $region8: #{_forward_impl.1} parent=1 // pred_region
      %s36 = ssub.s32 128, 128
      %37 = vsyncadd [#allocation3], %s36
      %s39 = sshll.u32 [#allocation6], 4
      %s40 = int_to_ptr.vmem [resolvable:$true] %s39
      %42 = dma.hbm_to_vmem [thread:$0]  %s1, 128, %s40, [#allocation3]
    $region9: #{_forward_impl.1} parent=1 // pred_fallthru
      _
    // Predicated region
    $region10: #{_forward_impl.1} parent=1 // pred_check
      _
    $region11: #{_forward_impl.1} parent=1 // pred_check_branch
      %44 = sbr.rel (0) target = $region13
    $region12: #{_forward_impl.1} parent=1 // pred_region
      %s46 = ssub.s32 256, 256
      %47 = vsyncadd [#allocation8], %s46
      %s48 = sshll.u32 [#allocation7], 4
      %s49 = int_to_ptr.vmem [resolvable:$true] %s48
      %54 = dma.hbm_to_vmem [thread:$0]  %s2, 256, %s49, [#allocation8], 128, 128, 8
    $region13: #{_forward_impl.1} parent=1 // pred_fallthru
      _
    // Predicated region
    $region14: #{_forward_impl.1} parent=1 // pred_check
      _
    $region15: #{_forward_impl.1} parent=1 // pred_check_branch
      %56 = sbr.rel (0) target = $region17
    $region16: #{_forward_impl.1} parent=1 // pred_region
      %s58 = ssub.s32 16, 16
      %59 = vsyncadd [#allocation8], %s58
      %s61 = sshll.u32 [#allocation9], 4
      %s62 = int_to_ptr.vmem [resolvable:$true] %s61
      %64 = dma.hbm_to_vmem [thread:$0]  %s3, 16, %s62, [#allocation8]
    $region17: #{_forward_impl.1} parent=1 // pred_fallthru
      _
    // Predicated region
    $region18: #{_forward_impl.1} parent=1 // pred_check
      _
    $region19: #{_forward_impl.1} parent=1 // pred_check_branch
      %66 = sbr.rel (0) target = $region21
    $region20: #{_forward_impl.1} parent=1 // pred_region
      %s68 = ssub.s32 2048, 2048
      %69 = vsyncadd [#allocation11], %s68
      %s70 = sshll.u32 [#allocation10], 4
      %s71 = int_to_ptr.vmem [resolvable:$true] %s70
      %76 = dma.hbm_to_vmem [thread:$0]  %s4, 2048, %s71, [#allocation11], 128, 128, 8
    $region21: #{_forward_impl.1} parent=1 // pred_fallthru
      _
    // Predicated region
    $region22: #{_forward_impl.1} parent=1 // pred_check
      _
    $region23: #{_forward_impl.1} parent=1 // pred_check_branch
      %78 = sbr.rel (0) target = $region25
    $region24: #{_forward_impl.1} parent=1 // pred_region
      _
    $region25: #{_forward_impl.1} parent=1 // pred_fallthru
      _
    // Predicated region
    $region26: #{_forward_impl.1} parent=1 // pred_check
      _
    $region27: #{_forward_impl.1} parent=1 // pred_check_branch
      %80 = sbr.rel (0) target = $region29
    $region28: #{_forward_impl.1} parent=1 // pred_region
      %s82 = ssub.s32 128, 128
      %83 = vsyncadd [#allocation11], %s82
      %s85 = sshll.u32 [#allocation12], 4
      %s86 = int_to_ptr.vmem [resolvable:$true] %s85
      %88 = dma.hbm_to_vmem [thread:$0]  %s6, 128, %s86, [#allocation11]
    $region29: #{_forward_impl.1} parent=1 // pred_fallthru
      _
    // Predicated region
    $region30: #{_forward_impl.1} parent=1 // pred_check
      _
    $region31: #{_forward_impl.1} parent=1 // pred_check_branch
      %90 = sbr.rel (0) target = $region33
    $region32: #{_forward_impl.1} parent=1 // pred_region
      _
    $region33: #{_forward_impl.1} parent=1 // pred_fallthru
      _
    // Predicated region
    $region34: #{_forward_impl.1} parent=1 // pred_check
      _
    $region35: #{_forward_impl.1} parent=1 // pred_check_branch
      %92 = sbr.rel (0) target = $region37
    $region36: #{_forward_impl.1} parent=1 // pred_region
      _
    $region37: #{_forward_impl.1} parent=1 // pred_fallthru
      _
    // Predicated region
    $region38: #{_forward_impl.1} parent=1 // pred_check
      _
    $region39: #{_forward_impl.1} parent=1 // pred_check_branch
      %94 = sbr.rel (0) target = $region41
    $region40: #{_forward_impl.1} parent=1 // pred_region
      %s96 = ssub.s32 2048, 2048
      %97 = vsyncadd [#allocation14], %s96
      %s98 = sshll.u32 [#allocation13], 4
      %s99 = int_to_ptr.vmem [resolvable:$true] %s98
      %104 = dma.hbm_to_vmem [thread:$0]  %s9, 2048, %s99, [#allocation14], 128, 128, 8
    $region41: #{_forward_impl.1} parent=1 // pred_fallthru
      _
    // Predicated region
    $region42: #{_forward_impl.1} parent=1 // pred_check
      _
    $region43: #{_forward_impl.1} parent=1 // pred_check_branch
      %106 = sbr.rel (0) target = $region45
    $region44: #{_forward_impl.1} parent=1 // pred_region
      _
    $region45: #{_forward_impl.1} parent=1 // pred_fallthru
      _
    // Predicated region
    $region46: #{_forward_impl.1} parent=1 // pred_check
      _
    $region47: #{_forward_impl.1} parent=1 // pred_check_branch
      %108 = sbr.rel (0) target = $region49
    $region48: #{_forward_impl.1} parent=1 // pred_region
      %109 = dma.done [#allocation5], 16
    $region49: #{_forward_impl.1} parent=1 // pred_fallthru
      _
    // Predicated region
    $region50: #{_forward_impl.1} parent=1 // pred_check
      _
    $region51: #{_forward_impl.1} parent=1 // pred_check_branch
      %111 = sbr.rel (0) target = $region53
    $region52: #{_forward_impl.1} parent=1 // pred_region
      %112 = dma.done [#allocation3], 128
    $region53: #{_forward_impl.1} parent=1 // pred_fallthru
      _
    // Predicated region
    $region54: #{_forward_impl.1} parent=1 // pred_check
      _
    $region55: #{_forward_impl.1} parent=1 // pred_check_branch
      %114 = sbr.rel (0) target = $region57
    $region56: #{_forward_impl.1} parent=1 // pred_region
      %115 = dma.done [#allocation8], 256
    $region57: #{_forward_impl.1} parent=1 // pred_fallthru
      _
    // Predicated region
    $region58: #{_forward_impl.1} parent=1 // pred_check
      _
    $region59: #{_forward_impl.1} parent=1 // pred_check_branch
      %117 = sbr.rel (0) target = $region61
    $region60: #{_forward_impl.1} parent=1 // pred_region
      %118 = dma.done [#allocation8], 16
    $region61: #{_forward_impl.1} parent=1 // pred_fallthru
      _
    // Predicated region
    $region62: #{_forward_impl.1} parent=1 // pred_check
      _
    $region63: #{_forward_impl.1} parent=1 // pred_check_branch
      %120 = sbr.rel (0) target = $region65
    $region64: #{_forward_impl.1} parent=1 // pred_region
      %121 = dma.done [#allocation11], 2048
    $region65: #{_forward_impl.1} parent=1 // pred_fallthru
      _
    // Predicated region
    $region66: #{_forward_impl.1} parent=1 // pred_check
      _
    $region67: #{_forward_impl.1} parent=1 // pred_check_branch
      %123 = sbr.rel (0) target = $region69
    $region68: #{_forward_impl.1} parent=1 // pred_region
      %124 = dma.done [#allocation11], 128
    $region69: #{_forward_impl.1} parent=1 // pred_fallthru
      _
    // Predicated region
    $region70: #{_forward_impl.1} parent=1 // pred_check
      _
    $region71: #{_forward_impl.1} parent=1 // pred_check_branch
      %126 = sbr.rel (0) target = $region73
    $region72: #{_forward_impl.1} parent=1 // pred_region
      %127 = dma.done [#allocation14], 2048
    $region73: #{_forward_impl.1} parent=1 // pred_fallthru
      _
    %128 = sfence
    %s129 = sld [smem:[#allocation2]]
    %s130 = sld [smem:[#allocation2 + $0x2]]
    %s131 = sld [smem:[#allocation2 + $0x3]]
    %v132 = vld [vmem:[#allocation6] sm:$0xff]
    %v133 = vld [vmem:[#allocation7] sm:$0xff]
    %v134 = vld [vmem:[#allocation7 + $0x8] sm:$0xff]
    %v135 = vld [vmem:[#allocation9] sm:$0x1]
    %v137 = vlaneseq
    %v138 = vshrl.u32 %v137, 7
    %v139 = vsub.s32 0, %v138
    %v140 = vrot.slane %v135, %v139
    %vm142 = vcmask 130048
    %v144 = vsel %vm142, %v132, 0
    %146 = vmatprep.subr.mxu0 0.0
    %147 = vmatpush1.msra.mxu0 %v133
    %148 = vmatprep.subr.mxu0 0.0
    %149 = vmatpush1.msra.mxu0 %v134
    %150 = vmatprep.subr.mxu0 0.0
    %151 = vmatpush1.msra.mxu0 0.0
    %152 = vmatprep.subr.mxu0 0.0
    %153 = vmatpush1.msra.mxu0 0.0
    %154 = vmatprep.subr.mxu0 0.0
    %155 = vmatpush1.msra.mxu0 0.0
    %156 = vmatprep.subr.mxu0 0.0
    %157 = vmatpush1.msra.mxu0 0.0
    %158 = vmatprep.subr.mxu0 0.0
    %159 = vmatpush1.msra.mxu0 0.0
    %160 = vmatprep.subr.mxu0 0.0
    %161 = vmatpush1.msra.mxu0 0.0
    %162 = vmatprep.subr.mxu0 0.0
    %163 = vmatpush1.msra.mxu0 0.0
    %164 = vmatprep.subr.mxu0 0.0
    %165 = vmatpush1.msra.mxu0 0.0
    %166 = vmatprep.subr.mxu0 0.0
    %167 = vmatpush1.msra.mxu0 0.0
    %168 = vmatprep.subr.mxu0 0.0
    %169 = vmatpush1.msra.mxu0 0.0
    %170 = vmatprep.subr.mxu0 0.0
    %171 = vmatpush1.msra.mxu0 0.0
    %172 = vmatprep.subr.mxu0 0.0
    %173 = vmatpush1.msra.mxu0 0.0
    %174 = vmatprep.subr.mxu0 0.0
    %175 = vmatpush1.msra.mxu0 0.0
    %176 = vmatprep.subr.mxu0 0.0
    %177 = vmatpush1.msra.mxu0 0.0
    %178 = vmatprep.subr.mxu0 0.0
    %179 = vmatpush1.msra.mxu0 0.0
    %180 = vmatprep.subr.mxu0 0.0
    %181 = vmatpush1.msra.mxu0 0.0
    %182 = vmatprep.subr.mxu0 0.0
    %183 = vmatpush1.msra.mxu0 0.0
    %184 = vmatprep.subr.mxu0 0.0
    %185 = vmatpush1.msra.mxu0 0.0
    %186 = vmatprep.subr.mxu0 0.0
    %187 = vmatpush1.msra.mxu0 0.0
    %188 = vmatprep.subr.mxu0 0.0
    %189 = vmatpush1.msra.mxu0 0.0
    %190 = vmatprep.subr.mxu0 0.0
    %191 = vmatpush1.msra.mxu0 0.0
    %192 = vmatprep.subr.mxu0 0.0
    %193 = vmatpush1.msra.mxu0 0.0
    %194 = vmatprep.subr.mxu0 0.0
    %195 = vmatpush1.msra.mxu0 0.0
    %196 = vmatprep.subr.mxu0 0.0
    %197 = vmatpush1.msra.mxu0 0.0
    %198 = vmatprep.subr.mxu0 0.0
    %199 = vmatpush1.msra.mxu0 0.0
    %200 = vmatprep.subr.mxu0 0.0
    %201 = vmatpush1.msra.mxu0 0.0
    %202 = vmatprep.subr.mxu0 0.0
    %203 = vmatpush1.msra.mxu0 0.0
    %204 = vmatprep.subr.mxu0 0.0
    %205 = vmatpush1.msra.mxu0 0.0
    %206 = vmatprep.subr.mxu0 0.0
    %207 = vmatpush1.msra.mxu0 0.0
    %208 = vmatprep.subr.mxu0 0.0
    %209 = vmatpush1.msra.mxu0 0.0
    %210 = vmatprep.mubr.f32.mxu0 0.0
    %211 = vmatmul.mubr.f32.gmra.mrb[0].mxu0 %v144
    %v212 = vpop.f32.mrb[0].mxu0
    %v213 = vadd.f32 %v140, %v212
    %v214 = vpop.f32.mrb[0].mxu0
    %215 = vdwg.mxu0
    %v216 = vstv %s129
    %v217 = vmul.f32 %v216, %v213
    %v218 = vadd.f32 %v217, %v217
    %v219 = vld [vmem:[#allocation10] sm:$0xff]
    %v220 = vld [vmem:[#allocation10 + $0x8] sm:$0xff]
    %v221 = vld [vmem:[#allocation10 + $0x10] sm:$0xff]
    %v222 = vld [vmem:[#allocation10 + $0x18] sm:$0xff]
    %v223 = vld [vmem:[#allocation10 + $0x20] sm:$0xff]
    %v224 = vld [vmem:[#allocation10 + $0x28] sm:$0xff]
    %v225 = vld [vmem:[#allocation10 + $0x30] sm:$0xff]
    %v226 = vld [vmem:[#allocation10 + $0x38] sm:$0xff]
    %v227 = vld [vmem:[#allocation10 + $0x40] sm:$0xff]
    %v228 = vld [vmem:[#allocation10 + $0x48] sm:$0xff]
    %v229 = vld [vmem:[#allocation10 + $0x50] sm:$0xff]
    %v230 = vld [vmem:[#allocation10 + $0x58] sm:$0xff]
    %v231 = vld [vmem:[#allocation10 + $0x60] sm:$0xff]
    %v232 = vld [vmem:[#allocation10 + $0x68] sm:$0xff]
    %v233 = vld [vmem:[#allocation10 + $0x70] sm:$0xff]
    %v234 = vld [vmem:[#allocation10 + $0x78] sm:$0xff]
    %v235 = vld [vmem:[%s5] sm:$0x1]
    %v237 = vlaneseq
    %v238 = vshrl.u32 %v237, 7
    %v239 = vsub.s32 0, %v238
    %v240 = vrot.slane %v235, %v239
    %242 = vmatprep.subr.mxu0 0.0
    %243 = vmatpush1.msra.mxu0 %v219
    %244 = vmatprep.subr.mxu0 0.0
    %245 = vmatpush1.msra.mxu0 %v220
    %246 = vmatprep.subr.mxu0 0.0
    %247 = vmatpush1.msra.mxu0 %v221
    %248 = vmatprep.subr.mxu0 0.0
    %249 = vmatpush1.msra.mxu0 %v222
    %250 = vmatprep.subr.mxu0 0.0
    %251 = vmatpush1.msra.mxu0 %v223
    %252 = vmatprep.subr.mxu0 0.0
    %253 = vmatpush1.msra.mxu0 %v224
    %254 = vmatprep.subr.mxu0 0.0
    %255 = vmatpush1.msra.mxu0 %v225
    %256 = vmatprep.subr.mxu0 0.0
    %257 = vmatpush1.msra.mxu0 %v226
    %258 = vmatprep.subr.mxu0 0.0
    %259 = vmatpush1.msra.mxu0 %v227
    %260 = vmatprep.subr.mxu0 0.0
    %261 = vmatpush1.msra.mxu0 %v228
    %262 = vmatprep.subr.mxu0 0.0
    %263 = vmatpush1.msra.mxu0 %v229
    %264 = vmatprep.subr.mxu0 0.0
    %265 = vmatpush1.msra.mxu0 %v230
    %266 = vmatprep.subr.mxu0 0.0
    %267 = vmatpush1.msra.mxu0 %v231
    %268 = vmatprep.subr.mxu0 0.0
    %269 = vmatpush1.msra.mxu0 %v232
    %270 = vmatprep.subr.mxu0 0.0
    %271 = vmatpush1.msra.mxu0 %v233
    %272 = vmatprep.subr.mxu0 0.0
    %273 = vmatpush1.msra.mxu0 %v234
    %274 = vmatprep.subr.mxu0 0.0
    %275 = vmatpush1.msra.mxu0 0.0
    %276 = vmatprep.subr.mxu0 0.0
    %277 = vmatpush1.msra.mxu0 0.0
    %278 = vmatprep.subr.mxu0 0.0
    %279 = vmatpush1.msra.mxu0 0.0
    %280 = vmatprep.subr.mxu0 0.0
    %281 = vmatpush1.msra.mxu0 0.0
    %282 = vmatprep.subr.mxu0 0.0
    %283 = vmatpush1.msra.mxu0 0.0
    %284 = vmatprep.subr.mxu0 0.0
    %285 = vmatpush1.msra.mxu0 0.0
    %286 = vmatprep.subr.mxu0 0.0
    %287 = vmatpush1.msra.mxu0 0.0
    %288 = vmatprep.subr.mxu0 0.0
    %289 = vmatpush1.msra.mxu0 0.0
    %290 = vmatprep.subr.mxu0 0.0
    %291 = vmatpush1.msra.mxu0 0.0
    %292 = vmatprep.subr.mxu0 0.0
    %293 = vmatpush1.msra.mxu0 0.0
    %294 = vmatprep.subr.mxu0 0.0
    %295 = vmatpush1.msra.mxu0 0.0
    %296 = vmatprep.subr.mxu0 0.0
    %297 = vmatpush1.msra.mxu0 0.0
    %298 = vmatprep.subr.mxu0 0.0
    %299 = vmatpush1.msra.mxu0 0.0
    %300 = vmatprep.subr.mxu0 0.0
    %301 = vmatpush1.msra.mxu0 0.0
    %302 = vmatprep.subr.mxu0 0.0
    %303 = vmatpush1.msra.mxu0 0.0
    %304 = vmatprep.subr.mxu0 0.0
    %305 = vmatpush1.msra.mxu0 0.0
    %306 = vmatprep.mubr.f32.mxu0 0.0
    %307 = vmatmul.mubr.f32.gmra.mrb[0].mxu0 %v218
    %v308 = vpop.f32.mrb[0].mxu0
    %v309 = vadd.f32 %v240, %v308
    %v310 = vpop.f32.mrb[0].mxu0
    %311 = vdwg.mxu0
    %v312 = vmax.f32 %v309, 0.0
    %v313 = vld [vmem:[%s7] sm:$0xff]
    %vm314 = vcmask 64512
    %v316 = vsel %vm314, %v313, 0
    %318 = vmatprep.subr.mxu0 0.0
    %319 = vmatpush1.msra.mxu0 %v312
    %320 = vmatprep.subr.mxu0 0.0
    %321 = vmatpush1.msra.mxu0 0.0
    %322 = vmatprep.subr.mxu0 0.0
    %323 = vmatpush1.msra.mxu0 0.0
    %324 = vmatprep.subr.mxu0 0.0
    %325 = vmatpush1.msra.mxu0 0.0
    %326 = vmatprep.subr.mxu0 0.0
    %327 = vmatpush1.msra.mxu0 0.0
    %328 = vmatprep.subr.mxu0 0.0
    %329 = vmatpush1.msra.mxu0 0.0
    %330 = vmatprep.subr.mxu0 0.0
    %331 = vmatpush1.msra.mxu0 0.0
    %332 = vmatprep.subr.mxu0 0.0
    %333 = vmatpush1.msra.mxu0 0.0
    %334 = vmatprep.subr.mxu0 0.0
    %335 = vmatpush1.msra.mxu0 0.0
    %336 = vmatprep.subr.mxu0 0.0
    %337 = vmatpush1.msra.mxu0 0.0
    %338 = vmatprep.subr.mxu0 0.0
    %339 = vmatpush1.msra.mxu0 0.0
    %340 = vmatprep.subr.mxu0 0.0
    %341 = vmatpush1.msra.mxu0 0.0
    %342 = vmatprep.subr.mxu0 0.0
    %343 = vmatpush1.msra.mxu0 0.0
    %344 = vmatprep.subr.mxu0 0.0
    %345 = vmatpush1.msra.mxu0 0.0
    %346 = vmatprep.subr.mxu0 0.0
    %347 = vmatpush1.msra.mxu0 0.0
    %348 = vmatprep.subr.mxu0 0.0
    %349 = vmatpush1.msra.mxu0 0.0
    %350 = vmatprep.subr.mxu0 0.0
    %351 = vmatpush1.msra.mxu0 0.0
    %352 = vmatprep.subr.mxu0 0.0
    %353 = vmatpush1.msra.mxu0 0.0
    %354 = vmatprep.subr.mxu0 0.0
    %355 = vmatpush1.msra.mxu0 0.0
    %356 = vmatprep.subr.mxu0 0.0
    %357 = vmatpush1.msra.mxu0 0.0
    %358 = vmatprep.subr.mxu0 0.0
    %359 = vmatpush1.msra.mxu0 0.0
    %360 = vmatprep.subr.mxu0 0.0
    %361 = vmatpush1.msra.mxu0 0.0
    %362 = vmatprep.subr.mxu0 0.0
    %363 = vmatpush1.msra.mxu0 0.0
    %364 = vmatprep.subr.mxu0 0.0
    %365 = vmatpush1.msra.mxu0 0.0
    %366 = vmatprep.subr.mxu0 0.0
    %367 = vmatpush1.msra.mxu0 0.0
    %368 = vmatprep.subr.mxu0 0.0
    %369 = vmatpush1.msra.mxu0 0.0
    %370 = vmatprep.subr.mxu0 0.0
    %371 = vmatpush1.msra.mxu0 0.0
    %372 = vmatprep.subr.mxu0 0.0
    %373 = vmatpush1.msra.mxu0 0.0
    %374 = vmatprep.subr.mxu0 0.0
    %375 = vmatpush1.msra.mxu0 0.0
    %376 = vmatprep.subr.mxu0 0.0
    %377 = vmatpush1.msra.mxu0 0.0
    %378 = vmatprep.subr.mxu0 0.0
    %379 = vmatpush1.msra.mxu0 0.0
    %380 = vmatprep.subr.mxu0 0.0
    %381 = vmatpush1.msra.mxu0 0.0
    %382 = vmatprep.mubr.f32.mxu0 0.0
    %383 = vmatmul.mubr.f32.gmra.mrb[0].mxu0 %v316
    %v384 = vpop.f32.mrb[0].mxu0
    %v385 = vadd.f32 0.0, %v384
    %v386 = vpop.f32.mrb[0].mxu0
    %387 = vdwg.mxu0
    %v388 = vld [vmem:[%s8] sm:$0xff]
    %v390 = vsel %vm314, %v388, 0
    %392 = vmatprep.subr.mxu0 0.0
    %393 = vmatpush1.msra.mxu0 %v385
    %394 = vmatprep.subr.mxu0 0.0
    %395 = vmatpush1.msra.mxu0 0.0
    %396 = vmatprep.subr.mxu0 0.0
    %397 = vmatpush1.msra.mxu0 0.0
    %398 = vmatprep.subr.mxu0 0.0
    %399 = vmatpush1.msra.mxu0 0.0
    %400 = vmatprep.subr.mxu0 0.0
    %401 = vmatpush1.msra.mxu0 0.0
    %402 = vmatprep.subr.mxu0 0.0
    %403 = vmatpush1.msra.mxu0 0.0
    %404 = vmatprep.subr.mxu0 0.0
    %405 = vmatpush1.msra.mxu0 0.0
    %406 = vmatprep.subr.mxu0 0.0
    %407 = vmatpush1.msra.mxu0 0.0
    %408 = vmatprep.subr.mxu0 0.0
    %409 = vmatpush1.msra.mxu0 0.0
    %410 = vmatprep.subr.mxu0 0.0
    %411 = vmatpush1.msra.mxu0 0.0
    %412 = vmatprep.subr.mxu0 0.0
    %413 = vmatpush1.msra.mxu0 0.0
    %414 = vmatprep.subr.mxu0 0.0
    %415 = vmatpush1.msra.mxu0 0.0
    %416 = vmatprep.subr.mxu0 0.0
    %417 = vmatpush1.msra.mxu0 0.0
    %418 = vmatprep.subr.mxu0 0.0
    %419 = vmatpush1.msra.mxu0 0.0
    %420 = vmatprep.subr.mxu0 0.0
    %421 = vmatpush1.msra.mxu0 0.0
    %422 = vmatprep.subr.mxu0 0.0
    %423 = vmatpush1.msra.mxu0 0.0
    %424 = vmatprep.subr.mxu0 0.0
    %425 = vmatpush1.msra.mxu0 0.0
    %426 = vmatprep.subr.mxu0 0.0
    %427 = vmatpush1.msra.mxu0 0.0
    %428 = vmatprep.subr.mxu0 0.0
    %429 = vmatpush1.msra.mxu0 0.0
    %430 = vmatprep.subr.mxu0 0.0
    %431 = vmatpush1.msra.mxu0 0.0
    %432 = vmatprep.subr.mxu0 0.0
    %433 = vmatpush1.msra.mxu0 0.0
    %434 = vmatprep.subr.mxu0 0.0
    %435 = vmatpush1.msra.mxu0 0.0
    %436 = vmatprep.subr.mxu0 0.0
    %437 = vmatpush1.msra.mxu0 0.0
    %438 = vmatprep.subr.mxu0 0.0
    %439 = vmatpush1.msra.mxu0 0.0
    %440 = vmatprep.subr.mxu0 0.0
    %441 = vmatpush1.msra.mxu0 0.0
    %442 = vmatprep.subr.mxu0 0.0
    %443 = vmatpush1.msra.mxu0 0.0
    %444 = vmatprep.subr.mxu0 0.0
    %445 = vmatpush1.msra.mxu0 0.0
    %446 = vmatprep.subr.mxu0 0.0
    %447 = vmatpush1.msra.mxu0 0.0
    %448 = vmatprep.subr.mxu0 0.0
    %449 = vmatpush1.msra.mxu0 0.0
    %450 = vmatprep.subr.mxu0 0.0
    %451 = vmatpush1.msra.mxu0 0.0
    %452 = vmatprep.subr.mxu0 0.0
    %453 = vmatpush1.msra.mxu0 0.0
    %454 = vmatprep.subr.mxu0 0.0
    %455 = vmatpush1.msra.mxu0 0.0
    %456 = vmatprep.mubr.f32.mxu0 0.0
    %457 = vmatmul.mubr.f32.gmra.mrb[0].mxu0 %v390
    %v458 = vpop.f32.mrb[0].mxu0
    %v459 = vadd.f32 0.0, %v458
    %v460 = vpop.f32.mrb[0].mxu0
    %461 = vdwg.mxu0
    %v462 = vstv %s130
    %v463 = vmul.f32 %v462, %v385
    %v464 = vstv %s131
    %v465 = vmul.f32 %v464, %v459
    %v466 = vadd.f32 %v463, %v465
    %467 = vst [vmem:[#allocation16] sm:$0xff] %v466
    %v468 = vld [vmem:[#allocation13] sm:$0xff]
    %v469 = vld [vmem:[#allocation13 + $0x8] sm:$0xff]
    %v470 = vld [vmem:[#allocation13 + $0x10] sm:$0xff]
    %v471 = vld [vmem:[#allocation13 + $0x18] sm:$0xff]
    %v472 = vld [vmem:[#allocation13 + $0x20] sm:$0xff]
    %v473 = vld [vmem:[#allocation13 + $0x28] sm:$0xff]
    %v474 = vld [vmem:[#allocation13 + $0x30] sm:$0xff]
    %v475 = vld [vmem:[#allocation13 + $0x38] sm:$0xff]
    %v476 = vld [vmem:[#allocation13 + $0x40] sm:$0xff]
    %v477 = vld [vmem:[#allocation13 + $0x48] sm:$0xff]
    %v478 = vld [vmem:[#allocation13 + $0x50] sm:$0xff]
    %v479 = vld [vmem:[#allocation13 + $0x58] sm:$0xff]
    %v480 = vld [vmem:[#allocation13 + $0x60] sm:$0xff]
    %v481 = vld [vmem:[#allocation13 + $0x68] sm:$0xff]
    %v482 = vld [vmem:[#allocation13 + $0x70] sm:$0xff]
    %v483 = vld [vmem:[#allocation13 + $0x78] sm:$0xff]
    %v484 = vld [vmem:[%s10] sm:$0x1]
    %v486 = vlaneseq
    %v487 = vshrl.u32 %v486, 7
    %v488 = vsub.s32 0, %v487
    %v489 = vrot.slane %v484, %v488
    %491 = vmatprep.subr.mxu0 0.0
    %492 = vmatpush1.msra.mxu0 %v468
    %493 = vmatprep.subr.mxu0 0.0
    %494 = vmatpush1.msra.mxu0 %v469
    %495 = vmatprep.subr.mxu0 0.0
    %496 = vmatpush1.msra.mxu0 %v470
    %497 = vmatprep.subr.mxu0 0.0
    %498 = vmatpush1.msra.mxu0 %v471
    %499 = vmatprep.subr.mxu0 0.0
    %500 = vmatpush1.msra.mxu0 %v472
    %501 = vmatprep.subr.mxu0 0.0
    %502 = vmatpush1.msra.mxu0 %v473
    %503 = vmatprep.subr.mxu0 0.0
    %504 = vmatpush1.msra.mxu0 %v474
    %505 = vmatprep.subr.mxu0 0.0
    %506 = vmatpush1.msra.mxu0 %v475
    %507 = vmatprep.subr.mxu0 0.0
    %508 = vmatpush1.msra.mxu0 %v476
    %509 = vmatprep.subr.mxu0 0.0
    %510 = vmatpush1.msra.mxu0 %v477
    %511 = vmatprep.subr.mxu0 0.0
    %512 = vmatpush1.msra.mxu0 %v478
    %513 = vmatprep.subr.mxu0 0.0
    %514 = vmatpush1.msra.mxu0 %v479
    %515 = vmatprep.subr.mxu0 0.0
    %516 = vmatpush1.msra.mxu0 %v480
    %517 = vmatprep.subr.mxu0 0.0
    %518 = vmatpush1.msra.mxu0 %v481
    %519 = vmatprep.subr.mxu0 0.0
    %520 = vmatpush1.msra.mxu0 %v482
    %521 = vmatprep.subr.mxu0 0.0
    %522 = vmatpush1.msra.mxu0 %v483
    %523 = vmatprep.subr.mxu0 0.0
    %524 = vmatpush1.msra.mxu0 0.0
    %525 = vmatprep.subr.mxu0 0.0
    %526 = vmatpush1.msra.mxu0 0.0
    %527 = vmatprep.subr.mxu0 0.0
    %528 = vmatpush1.msra.mxu0 0.0
    %529 = vmatprep.subr.mxu0 0.0
    %530 = vmatpush1.msra.mxu0 0.0
    %531 = vmatprep.subr.mxu0 0.0
    %532 = vmatpush1.msra.mxu0 0.0
    %533 = vmatprep.subr.mxu0 0.0
    %534 = vmatpush1.msra.mxu0 0.0
    %535 = vmatprep.subr.mxu0 0.0
    %536 = vmatpush1.msra.mxu0 0.0
    %537 = vmatprep.subr.mxu0 0.0
    %538 = vmatpush1.msra.mxu0 0.0
    %539 = vmatprep.subr.mxu0 0.0
    %540 = vmatpush1.msra.mxu0 0.0
    %541 = vmatprep.subr.mxu0 0.0
    %542 = vmatpush1.msra.mxu0 0.0
    %543 = vmatprep.subr.mxu0 0.0
    %544 = vmatpush1.msra.mxu0 0.0
    %545 = vmatprep.subr.mxu0 0.0
    %546 = vmatpush1.msra.mxu0 0.0
    %547 = vmatprep.subr.mxu0 0.0
    %548 = vmatpush1.msra.mxu0 0.0
    %549 = vmatprep.subr.mxu0 0.0
    %550 = vmatpush1.msra.mxu0 0.0
    %551 = vmatprep.subr.mxu0 0.0
    %552 = vmatpush1.msra.mxu0 0.0
    %553 = vmatprep.subr.mxu0 0.0
    %554 = vmatpush1.msra.mxu0 0.0
    %555 = vmatprep.mubr.f32.mxu0 0.0
    %556 = vmatmul.mubr.f32.gmra.mrb[0].mxu0 %v466
    %v557 = vpop.f32.mrb[0].mxu0
    %v558 = vadd.f32 %v489, %v557
    %v559 = vpop.f32.mrb[0].mxu0
    %560 = vdwg.mxu0
    %561 = vmax.xlane.f32.xlu0 %v558
    %v562 = vpop.xlane.xlu0 %561
    %v563 = vsub.f32 %v558, %v562
    %v564 = vmul.f32 %v563, 1.442695
    %v565 = vpow.pop %v564
    %566 = vadd.xlane.f32.xlu0 %v565
    %v567 = vpop.xlane.xlu0 %566
    %v568 = vlog2.pop %v567
    %v569 = vmul.f32 %v568, 0.6931472
    %v570 = vsub.f32 %v563, %v569
    %571 = vst [vmem:[#allocation15] sm:$0xff] %v570
    // Predicated region
    $region74: #{_forward_impl.1} parent=1 // pred_check
      _
    $region75: #{_forward_impl.1} parent=1 // pred_check_branch
      %573 = sbr.rel (0) target = $region77
    $region76: #{_forward_impl.1} parent=1 // pred_region
      %s575 = ssub.s32 128, 128
      %576 = vsyncadd [#allocation4], %s575
      %s578 = sshll.u32 [#allocation15], 4
      %s579 = int_to_ptr.vmem [resolvable:$true] %s578
      %581 = dma.vmem_to_hbm [thread:$0]  %s579, 128, %s11, [#allocation4]
    $region77: #{_forward_impl.1} parent=1 // pred_fallthru
      _
    // Predicated region
    $region78: #{_forward_impl.1} parent=1 // pred_check
      _
    $region79: #{_forward_impl.1} parent=1 // pred_check_branch
      %583 = sbr.rel (0) target = $region81
    $region80: #{_forward_impl.1} parent=1 // pred_region
      %s585 = ssub.s32 128, 128
      %586 = vsyncadd [#allocation17], %s585
      %s588 = sshll.u32 [#allocation16], 4
      %s589 = int_to_ptr.vmem [resolvable:$true] %s588
      %591 = dma.vmem_to_hbm [thread:$0]  %s589, 128, %s12, [#allocation17]
    $region81: #{_forward_impl.1} parent=1 // pred_fallthru
      _
    // Predicated region
    $region82: #{_forward_impl.1} parent=1 // pred_check
      _
    $region83: #{_forward_impl.1} parent=1 // pred_check_branch
      %593 = sbr.rel (0) target = $region85
    $region84: #{_forward_impl.1} parent=1 // pred_region
      %594 = dma.done [#allocation4], 128
    $region85: #{_forward_impl.1} parent=1 // pred_fallthru
      _
    // Predicated region
    $region86: #{_forward_impl.1} parent=1 // pred_check
      _
    $region87: #{_forward_impl.1} parent=1 // pred_check_branch
      %596 = sbr.rel (0) target = $region89
    $region88: #{_forward_impl.1} parent=1 // pred_region
      %597 = dma.done [#allocation17], 128
    $region89: #{_forward_impl.1} parent=1 // pred_fallthru
      _
    %598 = vsyncpa [#allocation3], 1
    %599 = vsyncpa [#allocation8], 1
    %600 = vsyncpa [#allocation11], 1
    %601 = vsyncpa [#allocation14], 1
    %602 = vsyncpa [#allocation4], 1
    %603 = vsyncpa [#allocation17], 1
    %604 = vsyncpa [#allocation5], 1

</llo_original>
